<compile_context>
chip_gen: v6e
topology: v6e:2x2x1
jax: 0.10.0
libtpu: 0.0.40
codegen_flags: <defaults>
</compile_context>

<pallas_src>
import jax
import jax.numpy as jnp
from jax.experimental import pallas as pl
from jax.experimental.pallas import tpu as pltpu


def net_kernel(x_ref, emb_ref, w_ih_ref, w_hh_ref, out_ref):
    B, L = x_ref.shape               # (batch_rows, tokens_per_row)
    V, E = emb_ref.shape             # (vocab, embed_dim)

    # --- in-kernel weights-only fold (Embedding @ W_ih^T), pre-scaled by the
    #     AvgPool1d(L) factor:  ep[v] = (1/L) * sum_e emb[v, e] * w_ih[0, e]
    #     (V,E) VPU multiply (sublane broadcast of w_ih row) + lane reduce.
    ep_col = jnp.sum(emb_ref[...] * w_ih_ref[...],
                     axis=1, keepdims=True) * (1.0 / L)          # (V, 1)

    whh = w_hh_ref[0, 0]             # scalar hidden-to-hidden weight, from SMEM

    # Token-id iota, one id per sublane, reused for every row's histogram.
    iota_v = jax.lax.broadcasted_iota(jnp.int32, (V, L), 0)      # (V, L)

    # --- serial hidden-size-1 recurrence over the B "unbatched" time steps ---
    # Only the tanh chain is serial; each step's z_t (fused embedding + avg-pool
    # + input projection as a token-count contraction) is independent, so the
    # scheduler overlaps it with the chain.  Raw h_t values are collected and
    # activated / stored ONCE at the end (no per-step sigmoid, no per-step store).
    # TODO(synk): switch to lax.fori_loop + a (1,B) VMEM scratch if B grows
    #             beyond a few dozen rows (keeps bundle count / vreg pressure flat).
    h = jnp.zeros((1, 1), jnp.float32)
    hs = []
    for t in range(B):                                           # B static -> unrolled
        row = x_ref[t:t + 1, :]                                  # (1, L) token ids
        counts = jnp.sum((row == iota_v).astype(jnp.float32),
                         axis=1, keepdims=True)                  # (V, 1) histogram
        z_t = jnp.sum(counts * ep_col, axis=0, keepdims=True)    # (1, 1)
        h = jnp.tanh(z_t + whh * h)
        hs.append(h)

    h_row = jnp.concatenate(hs, axis=1)                          # (1, B) lane-dense
    out_ref[...] = jax.nn.sigmoid(h_row)                         # one sigmoid, one store


def net_forward(x, emb, w_ih, w_hh):
    """x: (B, L) int32 token ids; emb: (V, E); w_ih: (1, E); w_hh: (1, 1).

    The wrapper does no math: raw weights go straight into the kernel; the only
    host-side op is the free (1, B) -> (B, 1) layout reshape of the output.
    """
    B, L = x.shape
    V, E = emb.shape
    cost = pl.CostEstimate(
        flops=2 * V * E + B * (2 * V * L + 2 * V + 4),
        transcendentals=2 * B,                                   # B tanh + B sigmoid
        bytes_accessed=4 * (x.size + emb.size + w_ih.size + w_hh.size + B),
    )
    out_row = pl.pallas_call(
        net_kernel,
        out_shape=jax.ShapeDtypeStruct((1, B), jnp.float32),     # lane-dense output
        in_specs=[
            pl.BlockSpec(memory_space=pltpu.MemorySpace.VMEM),   # x (token ids)
            pl.BlockSpec(memory_space=pltpu.MemorySpace.VMEM),   # embedding table
            pl.BlockSpec(memory_space=pltpu.MemorySpace.VMEM),   # W_ih row
            pl.BlockSpec(memory_space=pltpu.MemorySpace.SMEM),   # W_hh scalar
        ],
        out_specs=pl.BlockSpec(memory_space=pltpu.MemorySpace.VMEM),
        cost_estimate=cost,
    )(x, emb, w_ih, w_hh)
    return jnp.reshape(out_row, (B, 1))                          # layout plumbing only


def net_forward_ref(x, emb, w_ih, w_hh):
    """Pure-JAX reference with the original (unfused) math, for a sanity check."""
    B, L = x.shape
    e = emb[x]                               # (B, L, E)
    pooled = jnp.mean(e, axis=1)             # (B, E)  == AvgPool1d(L)+squeeze
    z = pooled @ w_ih.T                      # (B, 1)
    h = jnp.zeros((1,), jnp.float32)
    outs = []
    for t in range(B):
        h = jnp.tanh(z[t] + w_hh[0, 0] * h)
        outs.append(h)
    return jax.nn.sigmoid(jnp.stack(outs, axis=0))   # (B, 1)


if __name__ == "__main__":
    B, L, V, E, H = 2, 8, 28, 25, 1

    key = jax.random.PRNGKey(0)
    k_x, k_emb, k_wih, k_whh = jax.random.split(key, 4)

    # Deterministic synthetic parameters (shapes from nn.Embedding(28,25) and
    # nn.RNN(25, 1, bias=False)).  B>=2: PyTorch's x.squeeze() at B==1 hits a
    # different (degenerate) nn.RNN path that is not modeled here.
    x = jax.random.randint(k_x, (B, L), 0, V, dtype=jnp.int32)
    emb = jax.random.normal(k_emb, (V, E), dtype=jnp.float32)
    w_ih = jax.random.uniform(k_wih, (H, E), jnp.float32, minval=-1.0, maxval=1.0)
    w_hh = jax.random.uniform(k_whh, (H, H), jnp.float32, minval=-1.0, maxval=1.0)

    y_pred = net_forward(x, emb, w_ih, w_hh)
    y_pred = jax.block_until_ready(y_pred)

    y_ref = net_forward_ref(x, emb, w_ih, w_hh)
    assert y_pred.shape == (B, 1)
    assert jnp.allclose(y_pred, y_ref, rtol=1e-3, atol=1e-3), (y_pred, y_ref)

    print("KERNEL_OK")
</pallas_src>

<mosaic_0001>
module attributes {stable_mosaic.version = 11 : i64} {
  func.func @net_kernel(%arg0: memref<2x8xi32, #tpu.memory_space<vmem>>, %arg1: memref<28x25xf32, #tpu.memory_space<vmem>>, %arg2: memref<1x25xf32, #tpu.memory_space<vmem>>, %arg3: memref<1x1xf32, #tpu.memory_space<smem>>, %arg4: memref<1x2xf32, #tpu.memory_space<vmem>>) attributes {dimension_semantics = [], scalar_prefetch = 0 : i64, scratch_operands = 0 : i64, tpu.core_type = #tpu.core_type<tc>} {
    %c0 = arith.constant 0 : index
    %c0_0 = arith.constant 0 : index
    %0 = vector.load %arg1[%c0, %c0_0] : memref<28x25xf32, #tpu.memory_space<vmem>>, vector<28x25xf32>
    %c0_1 = arith.constant 0 : index
    %c0_2 = arith.constant 0 : index
    %1 = vector.load %arg2[%c0_1, %c0_2] : memref<1x25xf32, #tpu.memory_space<vmem>>, vector<1x25xf32>
    %2 = vector.broadcast %1 : vector<1x25xf32> to vector<28x25xf32>
    %3 = arith.mulf %0, %2 : vector<28x25xf32>
    %cst = arith.constant dense<0.000000e+00> : vector<28xf32>
    %4 = vector.multi_reduction <add>, %3, %cst [1] : vector<28x25xf32> to vector<28xf32>
    %5 = vector.shape_cast %4 : vector<28xf32> to vector<28x1xf32>
    %cst_3 = arith.constant 1.250000e-01 : f32
    %6 = vector.broadcast %cst_3 : f32 to vector<28x1xf32>
    %7 = arith.mulf %5, %6 : vector<28x1xf32>
    %c0_4 = arith.constant 0 : index
    %c0_5 = arith.constant 0 : index
    %8 = memref.load %arg3[%c0_4, %c0_5] : memref<1x1xf32, #tpu.memory_space<smem>>
    %9 = tpu.iota {dimensions = array<i32: 0>} : vector<28x8xi32>
    %cst_6 = arith.constant 0.000000e+00 : f32
    %10 = vector.broadcast %cst_6 : f32 to vector<1x1xf32>
    %c0_7 = arith.constant 0 : index
    %c0_8 = arith.constant 0 : index
    %11 = vector.load %arg0[%c0_7, %c0_8] : memref<2x8xi32, #tpu.memory_space<vmem>>, vector<1x8xi32>
    %12 = vector.broadcast %11 : vector<1x8xi32> to vector<28x8xi32>
    %13 = arith.cmpi eq, %12, %9 : vector<28x8xi32>
    %14 = arith.extui %13 : vector<28x8xi1> to vector<28x8xi32>
    %15 = arith.sitofp %14 : vector<28x8xi32> to vector<28x8xf32>
    %cst_9 = arith.constant dense<0.000000e+00> : vector<28xf32>
    %16 = vector.multi_reduction <add>, %15, %cst_9 [1] : vector<28x8xf32> to vector<28xf32>
    %17 = vector.shape_cast %16 : vector<28xf32> to vector<28x1xf32>
    %18 = arith.mulf %17, %7 : vector<28x1xf32>
    %cst_10 = arith.constant dense<0.000000e+00> : vector<1xf32>
    %19 = vector.multi_reduction <add>, %18, %cst_10 [0] : vector<28x1xf32> to vector<1xf32>
    %20 = vector.shape_cast %19 : vector<1xf32> to vector<1x1xf32>
    %21 = vector.broadcast %8 : f32 to vector<1x1xf32>
    %22 = arith.mulf %21, %10 : vector<1x1xf32>
    %23 = arith.addf %20, %22 : vector<1x1xf32>
    %24 = math.tanh %23 : vector<1x1xf32>
    %c1 = arith.constant 1 : index
    %c0_11 = arith.constant 0 : index
    %25 = vector.load %arg0[%c1, %c0_11] : memref<2x8xi32, #tpu.memory_space<vmem>>, vector<1x8xi32>
    %26 = vector.broadcast %25 : vector<1x8xi32> to vector<28x8xi32>
    %27 = arith.cmpi eq, %26, %9 : vector<28x8xi32>
    %28 = arith.extui %27 : vector<28x8xi1> to vector<28x8xi32>
    %29 = arith.sitofp %28 : vector<28x8xi32> to vector<28x8xf32>
    %cst_12 = arith.constant dense<0.000000e+00> : vector<28xf32>
    %30 = vector.multi_reduction <add>, %29, %cst_12 [1] : vector<28x8xf32> to vector<28xf32>
    %31 = vector.shape_cast %30 : vector<28xf32> to vector<28x1xf32>
    %32 = arith.mulf %31, %7 : vector<28x1xf32>
    %cst_13 = arith.constant dense<0.000000e+00> : vector<1xf32>
    %33 = vector.multi_reduction <add>, %32, %cst_13 [0] : vector<28x1xf32> to vector<1xf32>
    %34 = vector.shape_cast %33 : vector<1xf32> to vector<1x1xf32>
    %35 = vector.broadcast %8 : f32 to vector<1x1xf32>
    %36 = arith.mulf %35, %24 : vector<1x1xf32>
    %37 = arith.addf %34, %36 : vector<1x1xf32>
    %38 = math.tanh %37 : vector<1x1xf32>
    %39 = tpu.concatenate %24, %38 in 1 : vector<1x1xf32>, vector<1x1xf32> -> vector<1x2xf32>
    %40 = arith.negf %39 : vector<1x2xf32>
    %41 = math.exp %40 : vector<1x2xf32>
    %cst_14 = arith.constant 1.000000e+00 : f32
    %42 = vector.broadcast %cst_14 : f32 to vector<1x2xf32>
    %43 = arith.addf %42, %41 : vector<1x2xf32>
    %44 = arith.divf %42, %43 : vector<1x2xf32>
    %c0_15 = arith.constant 0 : index
    %c0_16 = arith.constant 0 : index
    %45 = vector.load %arg4[%c0_15, %c0_16] : memref<1x2xf32, #tpu.memory_space<vmem>>, vector<1x2xf32>
    tpu.vector_store %arg4[%c0_15, %c0_16], %44 {strides = array<i32>} : memref<1x2xf32, #tpu.memory_space<vmem>>, vector<1x2xf32>,
    return
  }
}

</mosaic_0001>

<llo_original>
// kernel: tpu_custom_call.1
$region0: #{tpu_custom_call.1}
  #allocation0 [shape = 'u32[]', space=smem, size = 0x4, offset = 0x4, fixed_abs, tag = 'smem constant byte address 0x4 - core index']
  #allocation1 [shape = 'u32[144,128]{1,0:T(1,128)}', space=vmem, size = 0x12000, scoped, tag = 'internal scratch']
  #allocation2 [shape = 'f32[1,1]{1,0:T(1,128)S(6)}', space=smem, size = 0x200, scoped, tag = 'scoped memory for tpu_custom_call.1']
  %s0 = inlined_call_operand.vmem [shape: s32[2,8], index: 0, kind: input, shape index: {}]
  %s1 = inlined_call_operand.hbm [shape: f32[28,25], index: 1, kind: input, shape index: {}]
  %s2 = inlined_call_operand.vmem [shape: f32[1,25], index: 2, kind: input, shape index: {}]
  %s3 = inlined_call_operand.<no memory space> [shape: f32[1,1], index: 3, kind: input, shape index: {}]
  %s4 = inlined_call_operand.hbm [shape: f32[1,2], index: 4, kind: output, shape index: {}]
  %s5 = sld [smem:[#allocation0]]
  $region30: #{tpu_custom_call.1} parent=0
    _
  %s7 = ssub.s32 1, %s5
  %s8 = scalar_select 0, %s7, %s5
  %9 = sst [smem:[#allocation2]] %s3
  $region1: #{tpu_custom_call.1} parent=0
    #allocation3 [shape = 'u8[16384]{0}', space=vmem, size = 0x4000, scoped, tag = 'input window, operand 1, single buffered']
    #allocation4 [shape = 's32[1]{0}', space=sflag, size = 0x4, scoped, tag = 'scoped memory for tpu_custom_call.1']
    #allocation5 [shape = 's32[1]{0}', space=sflag, size = 0x4, scoped, tag = 'scoped memory for tpu_custom_call.1']
    #allocation6 [shape = 'u8[512]{0}', space=vmem, size = 0x400, scoped, tag = 'output window, operand 0, single buffered']
    %10 = vsyncpa [#allocation4], 0
    %11 = vsyncpa [#allocation5], 0
    // Predicated region
    $region2: #{tpu_custom_call.1} parent=1 // pred_check
      _
    $region3: #{tpu_custom_call.1} parent=1 // pred_check_branch
      %13 = sbr.rel (0) target = $region5
    $region4: #{tpu_custom_call.1} parent=1 // pred_region
      _
    $region5: #{tpu_custom_call.1} parent=1 // pred_fallthru
      _
    // Predicated region
    $region6: #{tpu_custom_call.1} parent=1 // pred_check
      _
    $region7: #{tpu_custom_call.1} parent=1 // pred_check_branch
      %15 = sbr.rel (0) target = $region9
    $region8: #{tpu_custom_call.1} parent=1 // pred_region
      %s17 = ssub.s32 512, 512
      %18 = vsyncadd [#allocation4], %s17
      %s19 = sshll.u32 [#allocation3], 4
      %s20 = int_to_ptr.vmem [resolvable:$true] %s19
      %25 = dma.hbm_to_vmem [thread:$0]  %s1, 512, %s20, [#allocation4], 128, 128, 8
    $region9: #{tpu_custom_call.1} parent=1 // pred_fallthru
      _
    // Predicated region
    $region10: #{tpu_custom_call.1} parent=1 // pred_check
      _
    $region11: #{tpu_custom_call.1} parent=1 // pred_check_branch
      %27 = sbr.rel (0) target = $region13
    $region12: #{tpu_custom_call.1} parent=1 // pred_region
      _
    $region13: #{tpu_custom_call.1} parent=1 // pred_fallthru
      _
    // Predicated region
    $region14: #{tpu_custom_call.1} parent=1 // pred_check
      _
    $region15: #{tpu_custom_call.1} parent=1 // pred_check_branch
      %29 = sbr.rel (0) target = $region17
    $region16: #{tpu_custom_call.1} parent=1 // pred_region
      _
    $region17: #{tpu_custom_call.1} parent=1 // pred_fallthru
      _
    // Predicated region
    $region18: #{tpu_custom_call.1} parent=1 // pred_check
      _
    $region19: #{tpu_custom_call.1} parent=1 // pred_check_branch
      %31 = sbr.rel (0) target = $region21
    $region20: #{tpu_custom_call.1} parent=1 // pred_region
      %32 = dma.done [#allocation4], 512
    $region21: #{tpu_custom_call.1} parent=1 // pred_fallthru
      _
    %v33 = vld [vmem:[#allocation3] sm:$0xff]
    %v34 = vld [vmem:[#allocation3 + $0x8] sm:$0xff]
    %v35 = vld [vmem:[#allocation3 + $0x10] sm:$0xff]
    %v36 = vld [vmem:[#allocation3 + $0x18] sm:$0xf]
    %v37 = vld [vmem:[%s2] sm:$0x1]
    %v39 = vlaneseq
    %v40 = vshrl.u32 %v39, 7
    %v41 = vsub.s32 0, %v40
    %v42 = vrot.slane %v37, %v41
    %v44 = vmul.f32 %v33, %v42
    %v45 = vmul.f32 %v34, %v42
    %v46 = vmul.f32 %v35, %v42
    %v47 = vmul.f32 %v36, %v42
    %vm48 = vcmask 203776
    %v49 = vsel %vm48, %v44, 0.0
    %50 = vadd.xlane.f32.xlu0 %v49
    %v51 = vpop.xlane.xlu0 %50
    %v52 = vsel %vm48, %v45, 0.0
    %53 = vadd.xlane.f32.xlu0 %v52
    %v54 = vpop.xlane.xlu0 %53
    %v55 = vsel %vm48, %v46, 0.0
    %56 = vadd.xlane.f32.xlu0 %v55
    %v57 = vpop.xlane.xlu0 %56
    %vm58 = vcmask 199680
    %v59 = vsel %vm58, %v47, 0.0
    %60 = vadd.xlane.f32.xlu0 %v59
    %v61 = vpop.xlane.xlu0 %60
    %v62 = vmul.f32 %v51, 0.125
    %v63 = vmul.f32 %v54, 0.125
    %v64 = vmul.f32 %v57, 0.125
    %v65 = vmul.f32 %v61, 0.125
    %s66 = sld [smem:[#allocation2]]
    %v67 = vlaneseq
    %v68 = vshrl.u32 %v67, 7
    %v69 = vadd.s32 %v68, 8
    %v70 = vadd.s32 %v68, 16
    %v71 = vadd.s32 %v68, 24
    %v72 = vld [vmem:[%s0] sm:$0x1]
    %v73 = vlaneseq
    %v74 = vshrl.u32 %v73, 7
    %v75 = vsub.s32 0, %v74
    %v76 = vrot.slane %v72, %v75
    %vm77 = vcmp.eq.s32.totalorder %v76, %v68
    %vm78 = vcmp.eq.s32.totalorder %v76, %v69
    %vm79 = vcmp.eq.s32.totalorder %v76, %v70
    %vm80 = vcmp.eq.s32.totalorder %v76, %v71
    %v81 = vsel %vm77, 1, 0
    %v82 = vsel %vm78, 1, 0
    %v83 = vsel %vm79, 1, 0
    %v84 = vsel %vm80, 1, 0
    %v85 = vcvt.s32.f32 %v81
    %v86 = vcvt.s32.f32 %v82
    %v87 = vcvt.s32.f32 %v83
    %v88 = vcvt.s32.f32 %v84
    %vm89 = vcmask 64512
    %v90 = vsel %vm89, %v85, 0.0
    %91 = vadd.xlane.f32.xlu0 %v90
    %v92 = vpop.xlane.xlu0 %91
    %v93 = vsel %vm89, %v86, 0.0
    %94 = vadd.xlane.f32.xlu0 %v93
    %v95 = vpop.xlane.xlu0 %94
    %v96 = vsel %vm89, %v87, 0.0
    %97 = vadd.xlane.f32.xlu0 %v96
    %v98 = vpop.xlane.xlu0 %97
    %vm99 = vcmask 60416
    %v100 = vsel %vm99, %v88, 0.0
    %101 = vadd.xlane.f32.xlu0 %v100
    %v102 = vpop.xlane.xlu0 %101
    %v103 = vmul.f32 %v92, %v62
    %v104 = vmul.f32 %v95, %v63
    %v105 = vmul.f32 %v98, %v64
    %v106 = vmul.f32 %v102, %v65
    %v107 = vadd.f32 %v103, %v104
    %v108 = vadd.f32 %v107, %v105
    %vm109 = vcmask 1043456
    %v110 = vsel %vm109, %v106, 0.0
    %v111 = vadd.f32 %v108, %v110
    %v112 = vrot.slane %v111, 4
    %v113 = vadd.f32 %v111, %v112
    %v114 = vrot.slane %v113, 2
    %v115 = vadd.f32 %v113, %v114
    %v116 = vrot.slane %v115, 1
    %v117 = vadd.f32 %v115, %v116
    %v118 = vstv %s66
    %v119 = vmul.f32 %v118, 0.0
    %v120 = vadd.f32 %v117, %v119
    %v121 = vtanh.pop %v120
    %v122 = vld [vmem:[%s0 + $0x1] sm:$0x1]
    %v123 = vlaneseq
    %v124 = vshrl.u32 %v123, 7
    %v125 = vsub.s32 0, %v124
    %v126 = vrot.slane %v122, %v125
    %vm127 = vcmp.eq.s32.totalorder %v126, %v68
    %vm128 = vcmp.eq.s32.totalorder %v126, %v69
    %vm129 = vcmp.eq.s32.totalorder %v126, %v70
    %vm130 = vcmp.eq.s32.totalorder %v126, %v71
    %v131 = vsel %vm127, 1, 0
    %v132 = vsel %vm128, 1, 0
    %v133 = vsel %vm129, 1, 0
    %v134 = vsel %vm130, 1, 0
    %v135 = vcvt.s32.f32 %v131
    %v136 = vcvt.s32.f32 %v132
    %v137 = vcvt.s32.f32 %v133
    %v138 = vcvt.s32.f32 %v134
    %v139 = vsel %vm89, %v135, 0.0
    %140 = vadd.xlane.f32.xlu0 %v139
    %v141 = vpop.xlane.xlu0 %140
    %v142 = vsel %vm89, %v136, 0.0
    %143 = vadd.xlane.f32.xlu0 %v142
    %v144 = vpop.xlane.xlu0 %143
    %v145 = vsel %vm89, %v137, 0.0
    %146 = vadd.xlane.f32.xlu0 %v145
    %v147 = vpop.xlane.xlu0 %146
    %v148 = vsel %vm99, %v138, 0.0
    %149 = vadd.xlane.f32.xlu0 %v148
    %v150 = vpop.xlane.xlu0 %149
    %v151 = vmul.f32 %v141, %v62
    %v152 = vmul.f32 %v144, %v63
    %v153 = vmul.f32 %v147, %v64
    %v154 = vmul.f32 %v150, %v65
    %v155 = vadd.f32 %v151, %v152
    %v156 = vadd.f32 %v155, %v153
    %v157 = vsel %vm109, %v154, 0.0
    %v158 = vadd.f32 %v156, %v157
    %v159 = vrot.slane %v158, 4
    %v160 = vadd.f32 %v158, %v159
    %v161 = vrot.slane %v160, 2
    %v162 = vadd.f32 %v160, %v161
    %v163 = vrot.slane %v162, 1
    %v164 = vadd.f32 %v162, %v163
    %v165 = vmul.f32 %v118, %v121
    %v166 = vadd.f32 %v164, %v165
    %v167 = vtanh.pop %v166
    %vm168 = vcmask 7168
    %v169 = vsel %vm168, %v121, %v167
    %v170 = vxor.u32 %v169, 2147483648
    %v171 = vmul.f32 %v170, 1.442695
    %v172 = vpow.pop %v171
    %v173 = vadd.f32 %v172, 1.0
    %v174 = vrcp.pop %v173
    %v175 = vmul.f32 1.0, %v174
    %vm176 = vcmask 8192
    %177 = vst.msk [vmem:[#allocation6] sm:$0x1] %vm176, %v175
    // Predicated region
    $region22: #{tpu_custom_call.1} parent=1 // pred_check
      _
    $region23: #{tpu_custom_call.1} parent=1 // pred_check_branch
      %179 = sbr.rel (0) target = $region25
    $region24: #{tpu_custom_call.1} parent=1 // pred_region
      %s181 = ssub.s32 16, 16
      %182 = vsyncadd [#allocation5], %s181
      %s184 = sshll.u32 [#allocation6], 4
      %s185 = int_to_ptr.vmem [resolvable:$true] %s184
      %187 = dma.vmem_to_hbm [thread:$0]  %s185, 16, %s4, [#allocation5]
    $region25: #{tpu_custom_call.1} parent=1 // pred_fallthru
      _
    // Predicated region
    $region26: #{tpu_custom_call.1} parent=1 // pred_check
      _
    $region27: #{tpu_custom_call.1} parent=1 // pred_check_branch
      %189 = sbr.rel (0) target = $region29
    $region28: #{tpu_custom_call.1} parent=1 // pred_region
      %190 = dma.done [#allocation5], 16
    $region29: #{tpu_custom_call.1} parent=1 // pred_fallthru
      _
    %191 = vsyncpa [#allocation4], 1
    %192 = vsyncpa [#allocation5], 1

</llo_original>
